<compile_context>
chip_gen: v6e
topology: v6e:2x2x1
jax: 0.10.0
libtpu: 0.0.40
codegen_flags: <defaults>
</compile_context>

<pallas_src>
import functools

import jax
import jax.numpy as jnp
import numpy as np
from jax.experimental import pallas as pl
from jax.experimental.pallas import tpu as pltpu


# ---------------------------------------------------------------------------
# Kernel: per-pixel softmax over channels (sublane axis), gather target-class
# probability and per-pixel negative-log-likelihood.  O(N*C) hot path.
# Block layout: pred (1, C, TN)  -> channels on sublanes, pixels on lanes.
# Output block (1, 2, TN): sublane 0 = prob, sublane 1 = nll.
# ---------------------------------------------------------------------------
def _softmax_nll_kernel(pred_ref, tgt_ref, out_ref, *, ignore_index):
    logits = pred_ref[0].astype(jnp.float32)            # (C, TN)
    tgt = tgt_ref[0]                                     # (1, TN) int32
    valid = tgt != ignore_index                          # (1, TN) bool
    tgt_c = jnp.where(valid, tgt, 0)                     # target * valid_mask

    m = jnp.max(logits, axis=0, keepdims=True)           # (1, TN) reduce over C sublanes
    ex = jnp.exp(logits - m)                             # (C, TN) -- the only exp
    s = jnp.sum(ex, axis=0, keepdims=True)               # (1, TN)

    # One-hot via (C,1) iota broadcast against (1,TN) target: no (C,TN) i32 temp.
    cls = jax.lax.broadcasted_iota(jnp.int32, (logits.shape[0], 1), 0)
    onehot = cls == tgt_c                                 # (C, TN) bool
    x_t = jnp.sum(jnp.where(onehot, logits, 0.0), axis=0, keepdims=True)
    ex_t = jnp.sum(jnp.where(onehot, ex, 0.0), axis=0, keepdims=True)

    nll = jnp.log(s) - (x_t - m)                          # logsumexp - x_t (exact f32)
    # Exact divide on purpose: pl.reciprocal(approx=True) perturbs probs by ~1e-3
    # and can flip pixels across the OHEM threshold vs. the sort reference.
    p_t = ex_t / s
    prob = jnp.where(valid, p_t, 1.0)                     # prob.masked_fill_(~valid, 1)

    # Pack prob (sublane 0) and nll (sublane 1) into a single 2-sublane store.
    row = jax.lax.broadcasted_iota(jnp.int32, (2, 1), 0)
    out_ref[0] = jnp.where(row == 0, prob, nll)           # (2, TN)


# ---------------------------------------------------------------------------
# Tile planning: lane-dense tile (multiple of 128), VMEM-budgeted so the
# double-buffered pred block stays well under v7x's 32 MiB scoped limit, and
# the grid has >= 2 steps so both v7x TensorCores get work even when b == 1.
# The plane is padded up to n_tiles * tn (<= one extra tile of ignore pixels).
# ---------------------------------------------------------------------------
def _plan_tiles(hw, c, b, *, cap_pixels=32768, per_buffer_bytes=6 << 20):
    vmem_cap = max(128, (per_buffer_bytes // (max(c, 1) * 4)) // 128 * 128)
    cap = min(cap_pixels, vmem_cap)
    hw128 = pl.cdiv(hw, 128) * 128
    n_tiles = max(1, pl.cdiv(hw128, cap))
    if b * n_tiles < 2 and hw128 >= 256:
        n_tiles = 2                                       # keep both v7x TCs busy
    tn = pl.cdiv(pl.cdiv(hw128, n_tiles), 128) * 128
    return tn, n_tiles * tn


# ---------------------------------------------------------------------------
# Wrapper: OHEM cross-entropy (ignore_index=255, thresh=0.7, min_kept=256,
# use_weight=False, reduce=False  ->  CrossEntropyLoss(reduction='mean')).
# ---------------------------------------------------------------------------
def ohem_cross_entropy_2d(pred, target, *, ignore_index=255, thresh=0.7,
                          min_kept=256):
    b, c, h, w = pred.shape
    hw = h * w
    n = b * hw

    tn, hw_pad = _plan_tiles(hw, c, b)

    # NCHW consumed directly (free reshape, no wrapper transpose).  pred keeps
    # its native dtype on the HBM->VMEM path; pass bf16 logits to ~halve the
    # dominant HBM traffic (kernel upcasts to f32 after the load).
    pred3 = pred.reshape(b, c, hw)
    tgt3 = target.reshape(b, 1, hw).astype(jnp.int32)
    if hw_pad != hw:
        pred3 = jnp.pad(pred3, ((0, 0), (0, 0), (0, hw_pad - hw)))
        tgt3 = jnp.pad(tgt3, ((0, 0), (0, 0), (0, hw_pad - hw)),
                       constant_values=ignore_index)

    out = pl.pallas_call(
        functools.partial(_softmax_nll_kernel, ignore_index=ignore_index),
        out_shape=jax.ShapeDtypeStruct((b, 2, hw_pad), jnp.float32),
        grid=(b, hw_pad // tn),
        in_specs=[
            pl.BlockSpec((1, c, tn), lambda bi, ti: (bi, 0, ti)),
            pl.BlockSpec((1, 1, tn), lambda bi, ti: (bi, 0, ti)),
        ],
        out_specs=pl.BlockSpec((1, 2, tn), lambda bi, ti: (bi, 0, ti)),
        compiler_params=pltpu.CompilerParams(
            dimension_semantics=("parallel", "parallel")),
    )(pred3, tgt3)

    # Padding is sliced away here, so it cannot contaminate threshold or mean.
    mask_prob = out[:, 0, :hw].reshape(-1)
    nll_flat = out[:, 1, :hw].reshape(-1)

    valid = target.reshape(-1) != ignore_index
    num_valid = jnp.sum(valid.astype(jnp.int32))

    if min_kept > 0:
        k = min(n, int(min_kept))
        thresh_f = jnp.float32(thresh)

        # threshold = kth-smallest(prob) if it exceeds `thresh`, else `thresh`.
        # kth <= thresh  <=>  #{prob <= thresh} >= k, so the common case needs
        # only one fused O(N) count; the exact top_k runs only in the rare
        # branch of the lax.cond (bit-parity with the PyTorch sort either way).
        count_le = jnp.sum((mask_prob <= thresh_f).astype(jnp.int32))

        def _exact_kth():
            kth = -jax.lax.top_k(-mask_prob, k)[0][k - 1]
            return jnp.maximum(kth, thresh_f)

        threshold = jax.lax.cond(count_le >= k, lambda: thresh_f, _exact_kth)

        use_ohem = (num_valid >= min_kept) & (num_valid > 0)
        kept = jnp.where(use_ohem, valid & (mask_prob <= threshold), valid)
    else:
        kept = valid

    kept_f = kept.astype(jnp.float32)
    # CrossEntropyLoss(reduction='mean') over kept pixels.  All-ignored input
    # yields 0/0 = NaN, identical to the PyTorch reference.
    return jnp.sum(nll_flat * kept_f) / jnp.sum(kept_f)


# ---------------------------------------------------------------------------
# Pure-JAX reference (mirrors the PyTorch forward) for a sanity check.
# ---------------------------------------------------------------------------
def _reference(pred, target, *, ignore_index=255, thresh=0.7, min_kept=256):
    b, c, h, w = pred.shape
    n = b * h * w
    logits = jnp.transpose(pred, (0, 2, 3, 1)).reshape(n, c).astype(jnp.float32)
    tgt = target.reshape(-1).astype(jnp.int32)
    valid = tgt != ignore_index
    tgt_c = jnp.where(valid, tgt, 0)
    logp = jax.nn.log_softmax(logits, axis=-1)
    lp_t = jnp.take_along_axis(logp, tgt_c[:, None], axis=-1)[:, 0]
    mask_prob = jnp.where(valid, jnp.exp(lp_t), 1.0)
    num_valid = jnp.sum(valid.astype(jnp.int32))
    k = min(n, int(min_kept))
    kth = jnp.sort(mask_prob)[k - 1]
    threshold = jnp.where((min_kept > 0) & (kth > thresh), kth, jnp.float32(thresh))
    use_ohem = (num_valid >= min_kept) & (num_valid > 0)
    kept = jnp.where(use_ohem, valid & (mask_prob <= threshold), valid)
    kept_f = kept.astype(jnp.float32)
    return jnp.sum(-lp_t * kept_f) / jnp.sum(kept_f)


if __name__ == "__main__":
    key = jax.random.PRNGKey(0)
    b, c, h, w = 2, 4, 16, 16          # N = 512 pixels, min_kept = 256
    k_pred, k_tgt, k_ign = jax.random.split(key, 3)

    pred = jax.random.normal(k_pred, (b, c, h, w), dtype=jnp.float32)
    target = jax.random.randint(k_tgt, (b, h, w), 0, c, dtype=jnp.int32)
    # randomly mark ~12% of pixels as ignore_index
    ignore_mask = jax.random.uniform(k_ign, (b, h, w)) < 0.125
    target = jnp.where(ignore_mask, 255, target)

    loss_fn = jax.jit(ohem_cross_entropy_2d)
    loss = jax.block_until_ready(loss_fn(pred, target))

    ref = jax.block_until_ready(_reference(pred, target))
    np.testing.assert_allclose(np.asarray(loss), np.asarray(ref), rtol=1e-5, atol=1e-5)

    print("KERNEL_OK")
</pallas_src>

<mosaic_0001>
module attributes {stable_mosaic.version = 11 : i64} {
  func.func @_softmax_nll_kernel(%arg0: i32, %arg1: i32, %arg2: memref<1x4x256xf32, #tpu.memory_space<vmem>>, %arg3: memref<1x1x256xi32, #tpu.memory_space<vmem>>, %arg4: memref<1x2x256xf32, #tpu.memory_space<vmem>>) attributes {dimension_semantics = [#tpu.dimension_semantics<parallel>, #tpu.dimension_semantics<parallel>], iteration_bounds = array<i64: 2, 1>, scalar_prefetch = 0 : i64, scratch_operands = 0 : i64, tpu.core_type = #tpu.core_type<tc>, window_params = [{transform_indices = @transform_0, window_bounds = array<i64: 1, 4, 256>}, {transform_indices = @transform_1, window_bounds = array<i64: 1, 1, 256>}, {transform_indices = @transform_2, window_bounds = array<i64: 1, 2, 256>}]} {
    %c0 = arith.constant 0 : index
    %c0_0 = arith.constant 0 : index
    %c0_1 = arith.constant 0 : index
    %0 = vector.load %arg2[%c0, %c0_0, %c0_1] : memref<1x4x256xf32, #tpu.memory_space<vmem>>, vector<1x4x256xf32>
    %1 = vector.shape_cast %0 : vector<1x4x256xf32> to vector<4x256xf32>
    %c0_2 = arith.constant 0 : index
    %c0_3 = arith.constant 0 : index
    %c0_4 = arith.constant 0 : index
    %2 = vector.load %arg3[%c0_2, %c0_3, %c0_4] : memref<1x1x256xi32, #tpu.memory_space<vmem>>, vector<1x1x256xi32>
    %3 = vector.shape_cast %2 : vector<1x1x256xi32> to vector<1x256xi32>
    %c255_i32 = arith.constant 255 : i32
    %4 = vector.broadcast %c255_i32 : i32 to vector<1x256xi32>
    %5 = arith.cmpi ne, %3, %4 : vector<1x256xi32>
    %c0_i32 = arith.constant 0 : i32
    %6 = vector.broadcast %c0_i32 : i32 to vector<1x256xi32>
    %7 = arith.select %5, %3, %6 : vector<1x256xi1>, vector<1x256xi32>
    %cst = arith.constant dense<0xFF800000> : vector<256xf32>
    %8 = vector.multi_reduction <maximumf>, %1, %cst [0] : vector<4x256xf32> to vector<256xf32>
    %9 = vector.shape_cast %8 : vector<256xf32> to vector<1x256xf32>
    %10 = vector.broadcast %9 : vector<1x256xf32> to vector<4x256xf32>
    %11 = arith.subf %1, %10 : vector<4x256xf32>
    %12 = math.exp %11 : vector<4x256xf32>
    %cst_5 = arith.constant dense<0.000000e+00> : vector<256xf32>
    %13 = vector.multi_reduction <add>, %12, %cst_5 [0] : vector<4x256xf32> to vector<256xf32>
    %14 = vector.shape_cast %13 : vector<256xf32> to vector<1x256xf32>
    %15 = tpu.iota {dimensions = array<i32: 0>} : vector<4x1xi32>
    %16 = vector.broadcast %15 : vector<4x1xi32> to vector<4x256xi32>
    %17 = vector.broadcast %7 : vector<1x256xi32> to vector<4x256xi32>
    %18 = arith.cmpi eq, %16, %17 : vector<4x256xi32>
    %cst_6 = arith.constant 0.000000e+00 : f32
    %19 = vector.broadcast %cst_6 : f32 to vector<4x256xf32>
    %20 = arith.select %18, %1, %19 : vector<4x256xi1>, vector<4x256xf32>
    %cst_7 = arith.constant dense<0.000000e+00> : vector<256xf32>
    %21 = vector.multi_reduction <add>, %20, %cst_7 [0] : vector<4x256xf32> to vector<256xf32>
    %22 = vector.shape_cast %21 : vector<256xf32> to vector<1x256xf32>
    %cst_8 = arith.constant 0.000000e+00 : f32
    %23 = vector.broadcast %cst_8 : f32 to vector<4x256xf32>
    %24 = arith.select %18, %12, %23 : vector<4x256xi1>, vector<4x256xf32>
    %cst_9 = arith.constant dense<0.000000e+00> : vector<256xf32>
    %25 = vector.multi_reduction <add>, %24, %cst_9 [0] : vector<4x256xf32> to vector<256xf32>
    %26 = vector.shape_cast %25 : vector<256xf32> to vector<1x256xf32>
    %27 = math.log %14 : vector<1x256xf32>
    %28 = arith.subf %22, %9 : vector<1x256xf32>
    %29 = arith.subf %27, %28 : vector<1x256xf32>
    %30 = arith.divf %26, %14 : vector<1x256xf32>
    %cst_10 = arith.constant 1.000000e+00 : f32
    %31 = vector.broadcast %cst_10 : f32 to vector<1x256xf32>
    %32 = arith.select %5, %30, %31 : vector<1x256xi1>, vector<1x256xf32>
    %33 = tpu.iota {dimensions = array<i32: 0>} : vector<2x1xi32>
    %c0_i32_11 = arith.constant 0 : i32
    %34 = vector.broadcast %c0_i32_11 : i32 to vector<2x1xi32>
    %35 = arith.cmpi eq, %33, %34 : vector<2x1xi32>
    %36 = vector.shape_cast %35 : vector<2x1xi1> to vector<2x1xi1>
    %37 = vector.broadcast %36 : vector<2x1xi1> to vector<2x256xi1>
    %38 = vector.shape_cast %32 : vector<1x256xf32> to vector<1x256xf32>
    %39 = vector.broadcast %38 : vector<1x256xf32> to vector<2x256xf32>
    %40 = vector.shape_cast %29 : vector<1x256xf32> to vector<1x256xf32>
    %41 = vector.broadcast %40 : vector<1x256xf32> to vector<2x256xf32>
    %42 = arith.select %37, %39, %41 : vector<2x256xi1>, vector<2x256xf32>
    %c0_12 = arith.constant 0 : index
    %c0_13 = arith.constant 0 : index
    %c0_14 = arith.constant 0 : index
    %43 = vector.load %arg4[%c0_12, %c0_13, %c0_14] : memref<1x2x256xf32, #tpu.memory_space<vmem>>, vector<1x2x256xf32>
    %44 = vector.shape_cast %43 : vector<1x2x256xf32> to vector<2x256xf32>
    %45 = vector.shape_cast %42 : vector<2x256xf32> to vector<1x2x256xf32>
    tpu.vector_store %arg4[%c0_12, %c0_13, %c0_14], %45 {strides = array<i32>} : memref<1x2x256xf32, #tpu.memory_space<vmem>>, vector<1x2x256xf32>,
    return
  }
  func.func @transform_0(%arg0: i32, %arg1: i32) -> (i32, i32, i32) {
    %c0_i32 = arith.constant 0 : i32
    %c0_i32_0 = arith.constant 0 : i32
    return %arg0, %c0_i32, %arg1 : i32, i32, i32
  }
  func.func @transform_1(%arg0: i32, %arg1: i32) -> (i32, i32, i32) {
    %c0_i32 = arith.constant 0 : i32
    %c0_i32_0 = arith.constant 0 : i32
    return %arg0, %c0_i32, %arg1 : i32, i32, i32
  }
  func.func @transform_2(%arg0: i32, %arg1: i32) -> (i32, i32, i32) {
    %c0_i32 = arith.constant 0 : i32
    %c0_i32_0 = arith.constant 0 : i32
    return %arg0, %c0_i32, %arg1 : i32, i32, i32
  }
}

</mosaic_0001>

<llo_original>
// kernel: neg.0
$region0: #{neg.0}
  #allocation0 [shape = 's32[1]{0}', space=sflag, size = 0x4, scoped, tag = 'scoped memory for neg.0']
  %s0 = inlined_call_operand.vmem [shape: f32[2,1,256], index: 0, kind: input, shape index: {}]
  %s1 = inlined_call_operand.vmem [shape: f32[2,1,256], index: 1, kind: output, shape index: {}]
  %v2 = vld [vmem:[%s0] sm:$0x1]
  %3 = xla_tuple %v2
  %4 = xla_tuple %3
  %v5 = vxor.u32 %v2, 2147483648
  %6 = xla_tuple %v5
  %7 = vst [vmem:[%s1] sm:$0x1] %v5
  %s8 = scalar_lea.vmem %s0, 2
  %v9 = vld [vmem:[%s8] sm:$0x1]
  %10 = xla_tuple %v9
  %11 = xla_tuple %10
  %v12 = vxor.u32 %v9, 2147483648
  %13 = xla_tuple %v12
  %s14 = scalar_lea.vmem %s1, 2
  %15 = vst [vmem:[%s14] sm:$0x1] %v12
  %s16 = scalar_lea.vmem %s0, 1
  %v17 = vld [vmem:[%s16] sm:$0x1]
  %18 = xla_tuple %v17
  %19 = xla_tuple %18
  %v20 = vxor.u32 %v17, 2147483648
  %21 = xla_tuple %v20
  %s22 = scalar_lea.vmem %s1, 1
  %23 = vst [vmem:[%s22] sm:$0x1] %v20
  %s24 = scalar_lea.vmem %s0, 3
  %v25 = vld [vmem:[%s24] sm:$0x1]
  %26 = xla_tuple %v25
  %27 = xla_tuple %26
  %v28 = vxor.u32 %v25, 2147483648
  %29 = xla_tuple %v28
  %s30 = scalar_lea.vmem %s1, 3
  %31 = vst [vmem:[%s30] sm:$0x1] %v28

// kernel: ohem_cross_entropy_2d.1
$region0: #{ohem_cross_entropy_2d.1}
  #allocation0 [shape = 'u32[]', space=smem, size = 0x4, offset = 0x4, fixed_abs, tag = 'smem constant byte address 0x4 - core index']
  #allocation1 [shape = 'u32[144,128]{1,0:T(1,128)}', space=vmem, size = 0x12000, scoped, tag = 'internal scratch']
  %s0 = inlined_call_operand.vmem [shape: f32[2,4,256], index: 0, kind: input, shape index: {}]
  %s1 = inlined_call_operand.vmem [shape: s32[2,1,256], index: 1, kind: input, shape index: {}]
  %s2 = inlined_call_operand.vmem [shape: f32[2,2,256], index: 2, kind: output, shape index: {}]
  %s3 = sld [smem:[#allocation0]]
  $region41: #{ohem_cross_entropy_2d.1} parent=0
    _
  %s5 = ssub.s32 1, %s3
  %s6 = scalar_select 0, %s5, %s3
  loop: start=0, step=1, limit=4
  $region2: #{ohem_cross_entropy_2d.1} parent=0 // loop_pre_header
    _
  $region3: #{ohem_cross_entropy_2d.1} parent=0 // loop_header
    %s8 = sphi 0, %s12
    %p9 = scmp.ge.s32.totalorder %s8, 4
    %s15 = sphi 0, %s27
    %s16 = sphi 0, %s23
    %s17 = sphi 0, %s15
    %s18 = sphi 0, %s16
    %s19 = sphi 0, %s17
    %s20 = sphi 0, %s18
    %s32 = sphi 0, %s34
    %s35 = sphi 0, %s32
    %s36 = sphi 0, %s35
    %s52 = sphi 0, %s36
    %s60 = sphi 0, %s62
    %s63 = sphi 0, %s60
    %s64 = sphi 0, %s63
    %s80 = sphi 0, %s64
    %s88 = sphi 0, %s90
    %s91 = sphi 0, %s88
    %s92 = sphi 0, %s91
    %s108 = sphi 0, %s92
  $region4: #{ohem_cross_entropy_2d.1} parent=0 // loop_header_branch
    %11 = sbr.rel (%p9) target = $region8
  $region5: #{ohem_cross_entropy_2d.1} parent=0 // loop_body
    %s13 = ssub.s32 %s8, 1
    %s14 = ssub.s32 %s8, 2
    %s21 = sadd.s32 1, %s16
    %p22 = scmp.ge.s32.totalorder %s21, 1
    %s23 = scalar_select %p22, 0, %s21
    %s24 = sadd.s32 1, %s15
    %s25 = scalar_select %p22, %s24, %s15
    %p26 = scmp.ge.s32.totalorder %s25, 2
    %s27 = scalar_select %p26, 0, %s25
    %s28 = ssub.s32 %s15, %s27
    %s29 = ssub.s32 %s16, %s23
    %s30 = sor.u32 %s28, %s29
    %p31 = scmp.eq.s32.totalorder %s30, 0
    %s33 = sadd.s32 %s32, 1
    %s34 = scalar_select %p31, %s32, %s33
    %p37 = pneg %p31
    %p38 = scmp.eq.s32.totalorder %s8, 1
    %p39 = por %p37, %p38
    %p40 = scmp.ne.s32.totalorder %s32, %s35
    %p41 = scmp.eq.s32.totalorder %s8, 0
    %p42 = por %p40, %p41
    %p43 = scmp.ne.s32.totalorder %s32, %s35
    %p44 = scmp.eq.s32.totalorder %s13, 1
    %p45 = por %p43, %p44
    %p46 = scmp.ne.s32.totalorder %s35, %s36
    %p47 = scmp.eq.s32.totalorder %s13, 0
    %p48 = por %p46, %p47
    %p49 = scmp.ne.s32.totalorder %s35, %s36
    %p50 = scmp.eq.s32.totalorder %s14, 1
    %p51 = por %p49, %p50
    %p53 = scmp.ne.s32.totalorder %s36, %s52
    %p54 = scmp.eq.s32.totalorder %s14, 0
    %p55 = por %p53, %p54
    %s56 = ssub.s32 %s15, %s27
    %s57 = ssub.s32 %s16, %s23
    %s58 = sor.u32 %s56, %s57
    %p59 = scmp.eq.s32.totalorder %s58, 0
    %s61 = sadd.s32 %s60, 1
    %s62 = scalar_select %p59, %s60, %s61
    %p65 = pneg %p59
    %p66 = scmp.eq.s32.totalorder %s8, 1
    %p67 = por %p65, %p66
    %p68 = scmp.ne.s32.totalorder %s60, %s63
    %p69 = scmp.eq.s32.totalorder %s8, 0
    %p70 = por %p68, %p69
    %p71 = scmp.ne.s32.totalorder %s60, %s63
    %p72 = scmp.eq.s32.totalorder %s13, 1
    %p73 = por %p71, %p72
    %p74 = scmp.ne.s32.totalorder %s63, %s64
    %p75 = scmp.eq.s32.totalorder %s13, 0
    %p76 = por %p74, %p75
    %p77 = scmp.ne.s32.totalorder %s63, %s64
    %p78 = scmp.eq.s32.totalorder %s14, 1
    %p79 = por %p77, %p78
    %p81 = scmp.ne.s32.totalorder %s64, %s80
    %p82 = scmp.eq.s32.totalorder %s14, 0
    %p83 = por %p81, %p82
    %s84 = ssub.s32 %s15, %s27
    %s85 = ssub.s32 %s16, %s23
    %s86 = sor.u32 %s84, %s85
    %p87 = scmp.eq.s32.totalorder %s86, 0
    %s89 = sadd.s32 %s88, 1
    %s90 = scalar_select %p87, %s88, %s89
    %p93 = pneg %p87
    %p94 = scmp.eq.s32.totalorder %s8, 1
    %p95 = por %p93, %p94
    %p96 = scmp.ne.s32.totalorder %s88, %s91
    %p97 = scmp.eq.s32.totalorder %s8, 0
    %p98 = por %p96, %p97
    %p99 = scmp.ne.s32.totalorder %s88, %s91
    %p100 = scmp.eq.s32.totalorder %s13, 1
    %p101 = por %p99, %p100
    %p102 = scmp.ne.s32.totalorder %s91, %s92
    %p103 = scmp.eq.s32.totalorder %s13, 0
    %p104 = por %p102, %p103
    %p105 = scmp.ne.s32.totalorder %s91, %s92
    %p106 = scmp.eq.s32.totalorder %s14, 1
    %p107 = por %p105, %p106
    %p109 = scmp.ne.s32.totalorder %s92, %s108
    %p110 = scmp.eq.s32.totalorder %s14, 0
    %p111 = por %p109, %p110
    %p112 = scmp.le.s32.totalorder 1, %s8
    %p113 = scmp.lt.s32.totalorder %s8, 3
    %p114 = pnand %p112, %p113
    %p115 = pneg %p114
    // Predicated region
    $region9: #{ohem_cross_entropy_2d.1} parent=5 // pred_check
      _
    $region10: #{ohem_cross_entropy_2d.1} parent=5 // pred_check_branch
      %117 = sbr.rel (%p114) target = $region12
    $region11: #{ohem_cross_entropy_2d.1} parent=5 // pred_region
      %s118 = ssub.s32 %s8, 1
    $region12: #{ohem_cross_entropy_2d.1} parent=5 // pred_fallthru
      _
    %p119 = scmp.lt.s32.totalorder %s8, 2
    // Predicated region
    $region13: #{ohem_cross_entropy_2d.1} parent=5 // pred_check
      %p120 = pneg %p119
    $region14: #{ohem_cross_entropy_2d.1} parent=5 // pred_check_branch
      %122 = sbr.rel (%p120) target = $region16
    $region15: #{ohem_cross_entropy_2d.1} parent=5 // pred_region
      // Predicated region
      $region17: #{ohem_cross_entropy_2d.1} parent=15 // pred_check
        %p123 = pneg %p42
      $region18: #{ohem_cross_entropy_2d.1} parent=15 // pred_check_branch
        %125 = sbr.rel (%p123) target = $region20
      $region19: #{ohem_cross_entropy_2d.1} parent=15 // pred_region
        %s126 = smul.u32 2, %s16
        %p127 = scmp.lt.s32.totalorder %s15, 1
        %s128 = scalar_select %p127, %s15, 1
        %p129 = scmp.lt.s32.totalorder %s126, 1
        %s130 = scalar_select %p129, %s126, 1
        %s131 = smul.addr %s128, 2
        %s132 = sadd.s32 %s130, %s131
        %s133 = smul.addr %s132, 4
        %s134 = scalar_lea.vmem %s0, %s133
        %s135 = smul.u32 2, %s16
      $region20: #{ohem_cross_entropy_2d.1} parent=15 // pred_fallthru
        _
      // Predicated region
      $region21: #{ohem_cross_entropy_2d.1} parent=15 // pred_check
        %p136 = pneg %p70
      $region22: #{ohem_cross_entropy_2d.1} parent=15 // pred_check_branch
        %138 = sbr.rel (%p136) target = $region24
      $region23: #{ohem_cross_entropy_2d.1} parent=15 // pred_region
        %s139 = smul.u32 2, %s16
        %p140 = scmp.lt.s32.totalorder %s15, 1
        %s141 = scalar_select %p140, %s15, 1
        %p142 = scmp.lt.s32.totalorder %s139, 1
        %s143 = scalar_select %p142, %s139, 1
        %s144 = smul.addr %s141, 2
        %s145 = sadd.s32 %s143, %s144
        %s146 = scalar_lea.vmem %s1, %s145
        %s147 = smul.u32 2, %s16
      $region24: #{ohem_cross_entropy_2d.1} parent=15 // pred_fallthru
        _
    $region16: #{ohem_cross_entropy_2d.1} parent=5 // pred_fallthru
      _
    %p148 = scmp.le.s32.totalorder 1, %s8
    %p149 = scmp.lt.s32.totalorder %s8, 3
    %p150 = pnand %p148, %p149
    %p151 = pneg %p150
    // Predicated region
    $region25: #{ohem_cross_entropy_2d.1} parent=5 // pred_check
      _
    $region26: #{ohem_cross_entropy_2d.1} parent=5 // pred_check_branch
      %153 = sbr.rel (%p150) target = $region28
    $region27: #{ohem_cross_entropy_2d.1} parent=5 // pred_region
      %s154 = ssub.s32 %s8, 1
      %s155 = smul.u32 2, %s18
      %p156 = scmp.lt.s32.totalorder %s17, 1
      %s157 = scalar_select %p156, %s17, 1
      %p158 = scmp.lt.s32.totalorder %s155, 1
      %s159 = scalar_select %p158, %s155, 1
      %s160 = smul.addr %s157, 2
      %s161 = sadd.s32 %s159, %s160
      %s162 = smul.addr %s161, 4
      %s163 = scalar_lea.vmem %s0, %s162
      %p164 = pneg %p48
      %p165 = pneg %p45
      %s166 = smul.u32 2, %s18
      %p167 = scmp.lt.s32.totalorder %s17, 1
      %s168 = scalar_select %p167, %s17, 1
      %p169 = scmp.lt.s32.totalorder %s166, 1
      %s170 = scalar_select %p169, %s166, 1
      %s171 = smul.addr %s168, 2
      %s172 = sadd.s32 %s170, %s171
      %s173 = scalar_lea.vmem %s1, %s172
      %p174 = pneg %p76
      %p175 = pneg %p73
      %p176 = pneg %p104
      %p177 = pneg %p101
      %s178 = smul.u32 2, %s18
      %p179 = scmp.lt.s32.totalorder %s17, 1
      %s180 = scalar_select %p179, %s17, 1
      %p181 = scmp.lt.s32.totalorder %s178, 1
      %s182 = scalar_select %p181, %s178, 1
      %s183 = smul.addr %s180, 2
      %s184 = sadd.s32 %s182, %s183
      %s185 = smul.addr %s184, 2
      %s186 = scalar_lea.vmem %s2, %s185
      %s187 = smul.u32 2, %s18
      %p188 = scmp.lt.s32.totalorder %s17, 1
      %s189 = scalar_select %p188, %s17, 1
      %p190 = scmp.lt.s32.totalorder %s187, 1
      %s191 = scalar_select %p190, %s187, 1
      %s192 = smul.addr %s189, 2
      %s193 = sadd.s32 %s191, %s192
      %s194 = smul.addr %s193, 4
      %s195 = scalar_lea.vmem %s0, %s194
      %s196 = smul.u32 2, %s18
      %s197 = smul.u32 2, %s18
      %p198 = scmp.lt.s32.totalorder %s17, 1
      %s199 = scalar_select %p198, %s17, 1
      %p200 = scmp.lt.s32.totalorder %s197, 1
      %s201 = scalar_select %p200, %s197, 1
      %s202 = smul.addr %s199, 2
      %s203 = sadd.s32 %s201, %s202
      %s204 = scalar_lea.vmem %s1, %s203
      %s205 = smul.u32 2, %s18
      %s206 = smul.u32 2, %s18
      %p207 = scmp.lt.s32.totalorder %s17, 1
      %s208 = scalar_select %p207, %s17, 1
      %p209 = scmp.lt.s32.totalorder %s206, 1
      %s210 = scalar_select %p209, %s206, 1
      %s211 = smul.addr %s208, 2
      %s212 = sadd.s32 %s210, %s211
      %s213 = smul.addr %s212, 2
      %s214 = scalar_lea.vmem %s2, %s213
      %s215 = smul.u32 2, %s18
      %v216 = vld [vmem:[%s195] sm:$0xff]
      %v217 = vld [vmem:[%s204] sm:$0x3]
      %vm218 = vcmp.ne.s32.totalorder %v217, 255
      %v219 = vsel %vm218, %v217, 0
      %v221 = vcombine.high %v216, %v216
      %vm223 = vcmask 1043456
      %v224 = vsel %vm223, %v216, -inf
      %v225 = vrot.slane %v224, 4
      %v226 = vmax.f32 %v224, %v225
      %v227 = vrot.slane %v226, 2
      %v228 = vmax.f32 %v226, %v227
      %v229 = vrot.slane %v228, 1
      %v230 = vmax.f32 %v228, %v229
      %v231 = vsel %vm223, %v221, -inf
      %v232 = vrot.slane %v231, 4
      %v233 = vmax.f32 %v231, %v232
      %v234 = vrot.slane %v233, 2
      %v235 = vmax.f32 %v233, %v234
      %v236 = vrot.slane %v235, 1
      %v237 = vmax.f32 %v235, %v236
      %v240 = vcombine.low %v230, %v237
      %v242 = vsub.f32 %v216, %v240
      %v243 = vmul.f32 %v242, 1.442695
      %v244 = vpow.pop %v243
      %v246 = vcombine.high %v244, %v244
      %v248 = vsel %vm223, %v244, 0.0
      %v249 = vrot.slane %v248, 4
      %v250 = vadd.f32 %v248, %v249
      %v251 = vrot.slane %v250, 2
      %v252 = vadd.f32 %v250, %v251
      %v253 = vrot.slane %v252, 1
      %v254 = vadd.f32 %v252, %v253
      %v255 = vsel %vm223, %v246, 0.0
      %v256 = vrot.slane %v255, 4
      %v257 = vadd.f32 %v255, %v256
      %v258 = vrot.slane %v257, 2
      %v259 = vadd.f32 %v257, %v258
      %v260 = vrot.slane %v259, 1
      %v261 = vadd.f32 %v259, %v260
      %v262 = vlaneseq
      %v263 = vshrl.u32 %v262, 7
      %v264 = vlaneseq
      %v265 = vshrl.u32 %v264, 7
      %v266 = vsub.s32 0, %v265
      %v267 = vrot.slane %v219, %v266
      %v268 = vlaneseq
      %v269 = vshrl.u32 %v268, 7
      %v270 = vsub.s32 1, %v269
      %v271 = vrot.slane %v219, %v270
      %vm272 = vcmp.eq.s32.totalorder %v263, %v267
      %vm273 = vcmp.eq.s32.totalorder %v263, %v271
      %v274 = vsel %vm272, %v216, 0.0
      %v275 = vsel %vm273, %v221, 0.0
      %v276 = vsel %vm223, %v274, 0.0
      %v277 = vrot.slane %v276, 4
      %v278 = vadd.f32 %v276, %v277
      %v279 = vrot.slane %v278, 2
      %v280 = vadd.f32 %v278, %v279
      %v281 = vrot.slane %v280, 1
      %v282 = vadd.f32 %v280, %v281
      %v283 = vsel %vm223, %v275, 0.0
      %v284 = vrot.slane %v283, 4
      %v285 = vadd.f32 %v283, %v284
      %v286 = vrot.slane %v285, 2
      %v287 = vadd.f32 %v285, %v286
      %v288 = vrot.slane %v287, 1
      %v289 = vadd.f32 %v287, %v288
      %v290 = vsel %vm272, %v244, 0.0
      %v291 = vsel %vm273, %v246, 0.0
      %v292 = vsel %vm223, %v290, 0.0
      %v293 = vrot.slane %v292, 4
      %v294 = vadd.f32 %v292, %v293
      %v295 = vrot.slane %v294, 2
      %v296 = vadd.f32 %v294, %v295
      %v297 = vrot.slane %v296, 1
      %v298 = vadd.f32 %v296, %v297
      %v299 = vsel %vm223, %v291, 0.0
      %v300 = vrot.slane %v299, 4
      %v301 = vadd.f32 %v299, %v300
      %v302 = vrot.slane %v301, 2
      %v303 = vadd.f32 %v301, %v302
      %v304 = vrot.slane %v303, 1
      %v305 = vadd.f32 %v303, %v304
      %v306 = vlog2.pop %v254
      %v307 = vmul.f32 %v306, 0.6931472
      %v308 = vlog2.pop %v261
      %v309 = vmul.f32 %v308, 0.6931472
      %v310 = vsub.f32 %v282, %v230
      %v311 = vsub.f32 %v289, %v237
      %v312 = vsub.f32 %v307, %v310
      %v313 = vsub.f32 %v309, %v311
      %v314 = vrcp.pop %v254
      %v315 = vmul.f32 %v298, %v314
      %v316 = vrcp.pop %v261
      %v317 = vmul.f32 %v305, %v316
      %v320 = vcombine.low %v315, %v317
      %v322 = vunpack.c.l.s4 1966171168
      %v323 = vunpack.c.0.s8 %v322
      %v324 = vlaneseq
      %v325 = vshrl.u32 %v324, 7
      %v326 = vsub.s32 %v323, %v325
      %v327 = vrot.slane %v320, %v326
      %v329 = vunpack.c.l.s4 1966171168
      %v330 = vunpack.c.0.s8 %v329
      %v331 = vlaneseq
      %v332 = vshrl.u32 %v331, 7
      %v333 = vsub.s32 %v330, %v332
      %v334 = vrot.slane %v327, %v333
      %v336 = vsel %vm218, %v334, 1.0
      %vm337 = vcmp.eq.s32.totalorder %v263, 0
      %v338 = vsel %vm337, 1, 0
      %vm339 = vcmp.eq.s32.totalorder %v338, 1
      %v341 = vlaneseq
      %v342 = vshrl.u32 %v341, 7
      %v343 = vsub.s32 0, %v342
      %v344 = vrot.slane %v336, %v343
      %v345 = vlaneseq
      %v346 = vshrl.u32 %v345, 7
      %v347 = vsub.s32 1, %v346
      %v348 = vrot.slane %v336, %v347
      %v351 = vsel %vm339, %v344, %v312
      %v352 = vsel %vm339, %v348, %v313
      %v355 = vcombine.low %v351, %v352
      %v357 = vunpack.c.l.s4 1983009808
      %v358 = vunpack.c.0.s8 %v357
      %v359 = vlaneseq
      %v360 = vshrl.u32 %v359, 7
      %v361 = vsub.s32 %v358, %v360
      %v362 = vrot.slane %v355, %v361
      %364 = vst [vmem:[%s214] sm:$0xf] %v362
      %s365 = smul.u32 2, %s18
      %p366 = scmp.lt.s32.totalorder %s17, 1
      %s367 = scalar_select %p366, %s17, 1
      %p368 = scmp.lt.s32.totalorder %s365, 1
      %s369 = scalar_select %p368, %s365, 1
      %s370 = smul.addr %s367, 2
      %s371 = sadd.s32 %s369, %s370
      %s372 = smul.addr %s371, 2
      %s373 = scalar_lea.vmem %s2, %s372
      // Predicated region
      $region29: #{ohem_cross_entropy_2d.1} parent=27 // pred_check
        %p374 = pneg %p101
      $region30: #{ohem_cross_entropy_2d.1} parent=27 // pred_check_branch
        %376 = sbr.rel (%p374) target = $region32
      $region31: #{ohem_cross_entropy_2d.1} parent=27 // pred_region
        %s377 = smul.u32 2, %s18
      $region32: #{ohem_cross_entropy_2d.1} parent=27 // pred_fallthru
        _
    $region28: #{ohem_cross_entropy_2d.1} parent=5 // pred_fallthru
      _
    %p378 = scmp.le.s32.totalorder 2, %s8
    // Predicated region
    $region33: #{ohem_cross_entropy_2d.1} parent=5 // pred_check
      %p379 = pneg %p378
    $region34: #{ohem_cross_entropy_2d.1} parent=5 // pred_check_branch
      %381 = sbr.rel (%p379) target = $region36
    $region35: #{ohem_cross_entropy_2d.1} parent=5 // pred_region
      %s382 = ssub.s32 %s8, 2
      // Predicated region
      $region37: #{ohem_cross_entropy_2d.1} parent=35 // pred_check
        %p383 = pneg %p107
      $region38: #{ohem_cross_entropy_2d.1} parent=35 // pred_check_branch
        %385 = sbr.rel (%p383) target = $region40
      $region39: #{ohem_cross_entropy_2d.1} parent=35 // pred_region
        %s386 = smul.u32 2, %s20
        %p387 = scmp.lt.s32.totalorder %s19, 1
        %s388 = scalar_select %p387, %s19, 1
        %p389 = scmp.lt.s32.totalorder %s386, 1
        %s390 = scalar_select %p389, %s386, 1
        %s391 = smul.addr %s388, 2
        %s392 = sadd.s32 %s390, %s391
        %s393 = smul.addr %s392, 2
        %s394 = scalar_lea.vmem %s2, %s393
      $region40: #{ohem_cross_entropy_2d.1} parent=35 // pred_fallthru
        _
    $region36: #{ohem_cross_entropy_2d.1} parent=5 // pred_fallthru
      _
  $region6: #{ohem_cross_entropy_2d.1} parent=0 // loop_footer
    %s12 = sadd.s32 1, %s8
  $region7: #{ohem_cross_entropy_2d.1} parent=0 // loop_footer_branch
    %7 = sbr.rel target = $region3
  $region8: #{ohem_cross_entropy_2d.1} parent=0 // loop_exit
    _

</llo_original>
